<compile_context>
chip_gen: v6e
topology: v6e:2x2x1
jax: 0.10.0
libtpu: 0.0.40
codegen_flags: <defaults>
</compile_context>

<pallas_src>
import jax
import jax.numpy as jnp
from jax.experimental import pallas as pl
from jax.experimental.pallas import tpu as pltpu

LANES = 128                 # last dim maps to vreg lanes
SUBLANES = 8
SLAB_ALIGN = SUBLANES * LANES   # 1024: kernel prefix alignment
MAX_TILE_ROWS = 2048        # 1 MiB f32 per input block; x2 inputs x2 buffers ~= 4 MiB VMEM


def _pick_num_shards(total_blocks):
    """2 shards only on v7x (2 TensorCores/chip) and only if there's enough work."""
    if total_blocks < 16:
        return 1
    try:
        kind = jax.devices()[0].device_kind.lower()
    except Exception:
        return 1
    if "v7" in kind or "7x" in kind:
        # TODO(synk): verify 'parallel' actually splits the leading grid axis across
        # both TensorCores on v7x; if not, switch to pltpu.CORE_PARALLEL semantics.
        return 2
    return 1


def _make_l1_loss_kernel(rows):
    """rows = number of valid (fully populated) rows in the (rows, 128) slab."""

    def kernel(x_ref, y_ref, num_ref, den_ref):
        c = pl.program_id(0)          # shard (parallel)
        i = pl.program_id(1)          # row-block step within shard (reduction)

        @pl.when(i == 0)
        def _():
            num_ref[...] = jnp.zeros_like(num_ref)
            den_ref[...] = jnp.zeros_like(den_ref)

        tile_rows = x_ref.shape[0]
        blk = c * pl.num_programs(1) + i       # logical (unclamped) block index

        # Upcast in-kernel (keeps HBM traffic at the input dtype width).
        x = x_ref[...].astype(jnp.float32)
        y = y_ref[...].astype(jnp.float32)

        def fold(valid):
            # select (not multiply): garbage in masked slots (stale VMEM of a
            # partial edge block) never propagates.
            num_c = jnp.where(valid, jnp.abs(x - y), 0.0)
            den_c = jnp.where(valid, 1.0, 0.0)
            # Fold the tile down to one (8, LANES) block with pure VPU adds
            # (no cross-lane/XLU reduce on the hot path).
            num_ref[...] += num_c.reshape(-1, SUBLANES, LANES).sum(axis=0)
            den_ref[...] += den_c.reshape(-1, SUBLANES, LANES).sum(axis=0)

        # Fast path: block fully inside the valid prefix -> no index math at all.
        is_full = (blk + 1) * tile_rows <= rows

        @pl.when(is_full)
        def _():
            fold(y > 0.0)

        # Slow path: last partial block or clamped out-of-range shard step.
        # Row-granularity mask only (lanes are always fully populated per row).
        @pl.when(jnp.logical_not(is_full))
        def _():
            row0 = blk * tile_rows
            rid = jax.lax.broadcasted_iota(jnp.int32, (tile_rows, LANES), 0)
            fold(((row0 + rid) < rows) & (y > 0.0))

    return kernel


def l1_loss(x, y):
    """Masked L1 loss matching the PyTorch module: sum(|x-y|*(y>0)) / sum(y>0)."""
    assert x.shape == y.shape
    total = x.size

    x_flat = x.reshape(-1)
    y_flat = y.reshape(-1)

    # Static split: kernel handles the 1024-aligned prefix; the <=1023-element
    # ragged tail is folded in plain JAX (no pad / no full-tensor copy).
    kernel_elems = (total // SLAB_ALIGN) * SLAB_ALIGN

    if kernel_elems < total:
        x_tail = x_flat[kernel_elems:].astype(jnp.float32)
        y_tail = y_flat[kernel_elems:].astype(jnp.float32)
        tail_mask = (y_tail > 0.0).astype(jnp.float32)
        tail_num = jnp.sum(jnp.abs(x_tail - y_tail) * tail_mask)
        tail_den = jnp.sum(tail_mask)
    else:
        tail_num = jnp.float32(0.0)
        tail_den = jnp.float32(0.0)

    if kernel_elems == 0:
        # Degenerate tiny input: nothing for the kernel to do.
        return tail_num / tail_den

    rows = kernel_elems // LANES                      # multiple of 8
    if kernel_elems != total:
        x_slab = x_flat[:kernel_elems].reshape(rows, LANES)
        y_slab = y_flat[:kernel_elems].reshape(rows, LANES)
    else:
        x_slab = x_flat.reshape(rows, LANES)          # pure metadata reshape
        y_slab = y_flat.reshape(rows, LANES)

    tile_rows = min(MAX_TILE_ROWS, rows)              # multiple of 8
    total_blocks = pl.cdiv(rows, tile_rows)
    num_shards = _pick_num_shards(total_blocks)
    steps = pl.cdiv(total_blocks, num_shards)

    def in_map(c, i):
        # Clamp so out-of-range shard steps re-read a valid block; those steps
        # contribute nothing because the in-kernel row mask (computed from the
        # UNclamped block index) zeroes them out.
        return (jnp.minimum(c * steps + i, total_blocks - 1), 0)

    num_out, den_out = pl.pallas_call(
        _make_l1_loss_kernel(rows),
        out_shape=(
            jax.ShapeDtypeStruct((num_shards * SUBLANES, LANES), jnp.float32),
            jax.ShapeDtypeStruct((num_shards * SUBLANES, LANES), jnp.float32),
        ),
        grid_spec=pltpu.PrefetchScalarGridSpec(
            num_scalar_prefetch=0,
            grid=(num_shards, steps),
            in_specs=[
                pl.BlockSpec((tile_rows, LANES), in_map),
                pl.BlockSpec((tile_rows, LANES), in_map),
            ],
            out_specs=[
                pl.BlockSpec((SUBLANES, LANES), lambda c, i: (c, 0)),
                pl.BlockSpec((SUBLANES, LANES), lambda c, i: (c, 0)),
            ],
        ),
        compiler_params=pltpu.CompilerParams(
            dimension_semantics=("parallel", "arbitrary"),
            vmem_limit_bytes=32 * 1024 * 1024,
        ),
    )(x_slab, y_slab)

    num = jnp.sum(num_out) + tail_num
    den = jnp.sum(den_out) + tail_den
    # Matches the PyTorch module exactly: no clamp, so den == 0 -> NaN/Inf, same as torch.
    return num / den


if __name__ == "__main__":
    key = jax.random.PRNGKey(0)
    kx, ky = jax.random.split(key)
    # NCHW inputs, small shapes
    x = jax.random.normal(kx, (2, 4, 16, 16), dtype=jnp.float32)
    # target has both valid (>0) and invalid (<=0) pixels
    y = jax.random.normal(ky, (2, 4, 16, 16), dtype=jnp.float32)

    loss = jax.block_until_ready(l1_loss(x, y))

    # pure-JAX reference
    mask = (y > 0.0).astype(jnp.float32)
    ref = jnp.sum(jnp.abs(x - y) * mask) / jnp.sum(mask)

    assert jnp.allclose(loss, ref, rtol=1e-5, atol=1e-5), (loss, ref)
    print("KERNEL_OK")
</pallas_src>

<mosaic_0001>
module attributes {stable_mosaic.version = 11 : i64} {
  func.func @kernel(%arg0: i32, %arg1: i32, %arg2: memref<16x128xf32, #tpu.memory_space<vmem>>, %arg3: memref<16x128xf32, #tpu.memory_space<vmem>>, %arg4: memref<8x128xf32, #tpu.memory_space<vmem>>, %arg5: memref<8x128xf32, #tpu.memory_space<vmem>>) attributes {dimension_semantics = [#tpu.dimension_semantics<parallel>, #tpu.dimension_semantics<arbitrary>], iteration_bounds = array<i64: 1, 1>, scalar_prefetch = 0 : i64, scratch_operands = 0 : i64, tpu.core_type = #tpu.core_type<tc>, window_params = [{transform_indices = @transform_0, window_bounds = array<i64: 16, 128>}, {transform_indices = @transform_1, window_bounds = array<i64: 16, 128>}, {transform_indices = @transform_2, window_bounds = array<i64: 8, 128>}, {transform_indices = @transform_3, window_bounds = array<i64: 8, 128>}]} {
    %c0_i32 = arith.constant 0 : i32
    %0 = arith.cmpi eq, %arg1, %c0_i32 : i32
    %1 = arith.extui %0 : i1 to i32
    %c0_i32_0 = arith.constant 0 : i32
    %2 = arith.cmpi ne, %1, %c0_i32_0 : i32
    scf.if %2 {
      %cst = arith.constant 0.000000e+00 : f32
      %15 = vector.broadcast %cst : f32 to vector<8x128xf32>
      %c0_8 = arith.constant 0 : index
      %c0_9 = arith.constant 0 : index
      %16 = vector.load %arg4[%c0_8, %c0_9] : memref<8x128xf32, #tpu.memory_space<vmem>>, vector<8x128xf32>
      tpu.vector_store %arg4[%c0_8, %c0_9], %15 {strides = array<i32>} : memref<8x128xf32, #tpu.memory_space<vmem>>, vector<8x128xf32>,
      %cst_10 = arith.constant 0.000000e+00 : f32
      %17 = vector.broadcast %cst_10 : f32 to vector<8x128xf32>
      %c0_11 = arith.constant 0 : index
      %c0_12 = arith.constant 0 : index
      %18 = vector.load %arg5[%c0_11, %c0_12] : memref<8x128xf32, #tpu.memory_space<vmem>>, vector<8x128xf32>
      tpu.vector_store %arg5[%c0_11, %c0_12], %17 {strides = array<i32>} : memref<8x128xf32, #tpu.memory_space<vmem>>, vector<8x128xf32>,
    } else {
    }
    %c1_i32 = arith.constant 1 : i32
    %3 = arith.muli %arg0, %c1_i32 : i32
    %4 = arith.addi %3, %arg1 : i32
    %c0 = arith.constant 0 : index
    %c0_1 = arith.constant 0 : index
    %5 = vector.load %arg2[%c0, %c0_1] : memref<16x128xf32, #tpu.memory_space<vmem>>, vector<16x128xf32>
    %c0_2 = arith.constant 0 : index
    %c0_3 = arith.constant 0 : index
    %6 = vector.load %arg3[%c0_2, %c0_3] : memref<16x128xf32, #tpu.memory_space<vmem>>, vector<16x128xf32>
    %c1_i32_4 = arith.constant 1 : i32
    %7 = arith.addi %4, %c1_i32_4 : i32
    %c16_i32 = arith.constant 16 : i32
    %8 = arith.muli %7, %c16_i32 : i32
    %c16_i32_5 = arith.constant 16 : i32
    %9 = arith.cmpi sle, %8, %c16_i32_5 : i32
    %10 = arith.extui %9 : i1 to i32
    %c0_i32_6 = arith.constant 0 : i32
    %11 = arith.cmpi ne, %10, %c0_i32_6 : i32
    scf.if %11 {
      %cst = arith.constant 0.000000e+00 : f32
      %15 = vector.broadcast %cst : f32 to vector<16x128xf32>
      %16 = arith.cmpf ogt, %6, %15 : vector<16x128xf32>
      %17 = arith.subf %5, %6 : vector<16x128xf32>
      %18 = math.absf %17 : vector<16x128xf32>
      %cst_8 = arith.constant 0.000000e+00 : f32
      %19 = vector.broadcast %cst_8 : f32 to vector<16x128xf32>
      %20 = arith.select %16, %18, %19 : vector<16x128xi1>, vector<16x128xf32>
      %cst_9 = arith.constant 1.000000e+00 : f32
      %cst_10 = arith.constant 0.000000e+00 : f32
      %21 = vector.broadcast %cst_9 : f32 to vector<16x128xf32>
      %22 = vector.broadcast %cst_10 : f32 to vector<16x128xf32>
      %23 = arith.select %16, %21, %22 : vector<16x128xi1>, vector<16x128xf32>
      %c0_11 = arith.constant 0 : index
      %c0_12 = arith.constant 0 : index
      %24 = vector.load %arg4[%c0_11, %c0_12] : memref<8x128xf32, #tpu.memory_space<vmem>>, vector<8x128xf32>
      %25 = vector.shape_cast %20 : vector<16x128xf32> to vector<2x8x128xf32>
      %cst_13 = arith.constant dense<0.000000e+00> : vector<8x128xf32>
      %26 = vector.multi_reduction <add>, %25, %cst_13 [0] : vector<2x8x128xf32> to vector<8x128xf32>
      %27 = arith.addf %24, %26 : vector<8x128xf32>
      %c0_14 = arith.constant 0 : index
      %c0_15 = arith.constant 0 : index
      %28 = vector.load %arg4[%c0_14, %c0_15] : memref<8x128xf32, #tpu.memory_space<vmem>>, vector<8x128xf32>
      tpu.vector_store %arg4[%c0_14, %c0_15], %27 {strides = array<i32>} : memref<8x128xf32, #tpu.memory_space<vmem>>, vector<8x128xf32>,
      %c0_16 = arith.constant 0 : index
      %c0_17 = arith.constant 0 : index
      %29 = vector.load %arg5[%c0_16, %c0_17] : memref<8x128xf32, #tpu.memory_space<vmem>>, vector<8x128xf32>
      %30 = vector.shape_cast %23 : vector<16x128xf32> to vector<2x8x128xf32>
      %cst_18 = arith.constant dense<0.000000e+00> : vector<8x128xf32>
      %31 = vector.multi_reduction <add>, %30, %cst_18 [0] : vector<2x8x128xf32> to vector<8x128xf32>
      %32 = arith.addf %29, %31 : vector<8x128xf32>
      %c0_19 = arith.constant 0 : index
      %c0_20 = arith.constant 0 : index
      %33 = vector.load %arg5[%c0_19, %c0_20] : memref<8x128xf32, #tpu.memory_space<vmem>>, vector<8x128xf32>
      tpu.vector_store %arg5[%c0_19, %c0_20], %32 {strides = array<i32>} : memref<8x128xf32, #tpu.memory_space<vmem>>, vector<8x128xf32>,
    } else {
    }
    %true = arith.constant true
    %12 = arith.xori %9, %true : i1
    %13 = arith.extui %12 : i1 to i32
    %c0_i32_7 = arith.constant 0 : i32
    %14 = arith.cmpi ne, %13, %c0_i32_7 : i32
    scf.if %14 {
      %c16_i32_8 = arith.constant 16 : i32
      %15 = arith.muli %4, %c16_i32_8 : i32
      %16 = tpu.iota {dimensions = array<i32: 0>} : vector<16x128xi32>
      %17 = vector.broadcast %15 : i32 to vector<16x128xi32>
      %18 = arith.addi %17, %16 : vector<16x128xi32>
      %c16_i32_9 = arith.constant 16 : i32
      %19 = vector.broadcast %c16_i32_9 : i32 to vector<16x128xi32>
      %20 = arith.cmpi slt, %18, %19 : vector<16x128xi32>
      %cst = arith.constant 0.000000e+00 : f32
      %21 = vector.broadcast %cst : f32 to vector<16x128xf32>
      %22 = arith.cmpf ogt, %6, %21 : vector<16x128xf32>
      %23 = arith.andi %20, %22 : vector<16x128xi1>
      %24 = arith.subf %5, %6 : vector<16x128xf32>
      %25 = math.absf %24 : vector<16x128xf32>
      %cst_10 = arith.constant 0.000000e+00 : f32
      %26 = vector.broadcast %cst_10 : f32 to vector<16x128xf32>
      %27 = arith.select %23, %25, %26 : vector<16x128xi1>, vector<16x128xf32>
      %cst_11 = arith.constant 1.000000e+00 : f32
      %cst_12 = arith.constant 0.000000e+00 : f32
      %28 = vector.broadcast %cst_11 : f32 to vector<16x128xf32>
      %29 = vector.broadcast %cst_12 : f32 to vector<16x128xf32>
      %30 = arith.select %23, %28, %29 : vector<16x128xi1>, vector<16x128xf32>
      %c0_13 = arith.constant 0 : index
      %c0_14 = arith.constant 0 : index
      %31 = vector.load %arg4[%c0_13, %c0_14] : memref<8x128xf32, #tpu.memory_space<vmem>>, vector<8x128xf32>
      %32 = vector.shape_cast %27 : vector<16x128xf32> to vector<2x8x128xf32>
      %cst_15 = arith.constant dense<0.000000e+00> : vector<8x128xf32>
      %33 = vector.multi_reduction <add>, %32, %cst_15 [0] : vector<2x8x128xf32> to vector<8x128xf32>
      %34 = arith.addf %31, %33 : vector<8x128xf32>
      %c0_16 = arith.constant 0 : index
      %c0_17 = arith.constant 0 : index
      %35 = vector.load %arg4[%c0_16, %c0_17] : memref<8x128xf32, #tpu.memory_space<vmem>>, vector<8x128xf32>
      tpu.vector_store %arg4[%c0_16, %c0_17], %34 {strides = array<i32>} : memref<8x128xf32, #tpu.memory_space<vmem>>, vector<8x128xf32>,
      %c0_18 = arith.constant 0 : index
      %c0_19 = arith.constant 0 : index
      %36 = vector.load %arg5[%c0_18, %c0_19] : memref<8x128xf32, #tpu.memory_space<vmem>>, vector<8x128xf32>
      %37 = vector.shape_cast %30 : vector<16x128xf32> to vector<2x8x128xf32>
      %cst_20 = arith.constant dense<0.000000e+00> : vector<8x128xf32>
      %38 = vector.multi_reduction <add>, %37, %cst_20 [0] : vector<2x8x128xf32> to vector<8x128xf32>
      %39 = arith.addf %36, %38 : vector<8x128xf32>
      %c0_21 = arith.constant 0 : index
      %c0_22 = arith.constant 0 : index
      %40 = vector.load %arg5[%c0_21, %c0_22] : memref<8x128xf32, #tpu.memory_space<vmem>>, vector<8x128xf32>
      tpu.vector_store %arg5[%c0_21, %c0_22], %39 {strides = array<i32>} : memref<8x128xf32, #tpu.memory_space<vmem>>, vector<8x128xf32>,
    } else {
    }
    return
  }
  func.func @transform_0(%arg0: i32, %arg1: i32) -> (i32, i32) {
    %c1_i32 = arith.constant 1 : i32
    %0 = arith.muli %arg0, %c1_i32 : i32
    %1 = arith.addi %0, %arg1 : i32
    %c0_i32 = arith.constant 0 : i32
    %2 = arith.minsi %1, %c0_i32 : i32
    %c0_i32_0 = arith.constant 0 : i32
    %c0_i32_1 = arith.constant 0 : i32
    return %2, %c0_i32_0 : i32, i32
  }
  func.func @transform_1(%arg0: i32, %arg1: i32) -> (i32, i32) {
    %c1_i32 = arith.constant 1 : i32
    %0 = arith.muli %arg0, %c1_i32 : i32
    %1 = arith.addi %0, %arg1 : i32
    %c0_i32 = arith.constant 0 : i32
    %2 = arith.minsi %1, %c0_i32 : i32
    %c0_i32_0 = arith.constant 0 : i32
    %c0_i32_1 = arith.constant 0 : i32
    return %2, %c0_i32_0 : i32, i32
  }
  func.func @transform_2(%arg0: i32, %arg1: i32) -> (i32, i32) {
    %c0_i32 = arith.constant 0 : i32
    %c0_i32_0 = arith.constant 0 : i32
    return %arg0, %c0_i32 : i32, i32
  }
  func.func @transform_3(%arg0: i32, %arg1: i32) -> (i32, i32) {
    %c0_i32 = arith.constant 0 : i32
    %c0_i32_0 = arith.constant 0 : i32
    return %arg0, %c0_i32 : i32, i32
  }
}

</mosaic_0001>

<llo_original>
// kernel: tpu_custom_call.1
$region0: #{tpu_custom_call.1}
  #allocation0 [shape = 'u32[]', space=smem, size = 0x4, offset = 0x4, fixed_abs, tag = 'smem constant byte address 0x4 - core index']
  #allocation1 [shape = 'u32[144,128]{1,0:T(1,128)}', space=vmem, size = 0x12000, scoped, tag = 'internal scratch']
  %s0 = inlined_call_operand.hbm [shape: f32[16,128], index: 0, kind: input, shape index: {}]
  %s1 = inlined_call_operand.hbm [shape: f32[16,128], index: 1, kind: input, shape index: {}]
  %s2 = inlined_call_operand.hbm [shape: f32[8,128], index: 2, kind: output, shape index: {0}]
  %s3 = inlined_call_operand.hbm [shape: f32[8,128], index: 3, kind: output, shape index: {1}]
  %4 = xla_tuple %s2, %s3
  %s5 = sld [smem:[#allocation0]]
  $region46: #{tpu_custom_call.1} parent=0
    _
  %s7 = ssub.s32 1, %s5
  %s8 = scalar_select 0, %s7, %s5
  $region1: #{tpu_custom_call.1} parent=0
    #allocation2 [shape = 'u8[8192]{0}', space=vmem, size = 0x2000, scoped, tag = 'input window, operand 0, single buffered']
    #allocation3 [shape = 's32[1]{0}', space=sflag, size = 0x4, scoped, tag = 'scoped memory for tpu_custom_call.1']
    #allocation4 [shape = 's32[1]{0}', space=sflag, size = 0x4, scoped, tag = 'scoped memory for tpu_custom_call.1']
    #allocation5 [shape = 'u8[8192]{0}', space=vmem, size = 0x2000, scoped, tag = 'input window, operand 1, single buffered']
    #allocation6 [shape = 's32[1]{0}', space=sflag, size = 0x4, scoped, tag = 'scoped memory for tpu_custom_call.1']
    #allocation7 [shape = 'u8[4096]{0}', space=vmem, size = 0x1000, scoped, tag = 'output window, operand 0, single buffered']
    #allocation8 [shape = 'u8[4096]{0}', space=vmem, size = 0x1000, scoped, tag = 'output window, operand 1, single buffered']
    #allocation9 [shape = 's32[1]{0}', space=sflag, size = 0x4, scoped, tag = 'scoped memory for tpu_custom_call.1']
    %9 = vsyncpa [#allocation3], 0
    %10 = vsyncpa [#allocation6], 0
    %11 = vsyncpa [#allocation4], 0
    %12 = vsyncpa [#allocation9], 0
    // Predicated region
    $region2: #{tpu_custom_call.1} parent=1 // pred_check
      _
    $region3: #{tpu_custom_call.1} parent=1 // pred_check_branch
      %14 = sbr.rel (0) target = $region5
    $region4: #{tpu_custom_call.1} parent=1 // pred_region
      %s15 = sadd.s32 0, 0
      %p16 = scmp.lt.s32.totalorder %s15, 0
      %s17 = scalar_select %p16, %s15, 0
      %s18 = smul.u32 2, %s17
      %s20 = ssub.s32 256, 256
      %21 = vsyncadd [#allocation3], %s20
      %s22 = smul.addr %s18, 128
      %s23 = scalar_lea.hbm %s0, %s22
      %s24 = sshll.u32 [#allocation2], 4
      %s25 = int_to_ptr.vmem [resolvable:$true] %s24
      %30 = dma.hbm_to_vmem [thread:$0]  %s23, 256, %s25, [#allocation3], 128, 128, 8
    $region5: #{tpu_custom_call.1} parent=1 // pred_fallthru
      _
    // Predicated region
    $region6: #{tpu_custom_call.1} parent=1 // pred_check
      _
    $region7: #{tpu_custom_call.1} parent=1 // pred_check_branch
      %32 = sbr.rel (0) target = $region9
    $region8: #{tpu_custom_call.1} parent=1 // pred_region
      %s33 = sadd.s32 0, 0
      %p34 = scmp.lt.s32.totalorder %s33, 0
      %s35 = scalar_select %p34, %s33, 0
      %s36 = smul.u32 2, %s35
      %s38 = ssub.s32 256, 256
      %39 = vsyncadd [#allocation6], %s38
      %s40 = smul.addr %s36, 128
      %s41 = scalar_lea.hbm %s1, %s40
      %s42 = sshll.u32 [#allocation5], 4
      %s43 = int_to_ptr.vmem [resolvable:$true] %s42
      %48 = dma.hbm_to_vmem [thread:$0]  %s41, 256, %s43, [#allocation6], 128, 128, 8
    $region9: #{tpu_custom_call.1} parent=1 // pred_fallthru
      _
    // Predicated region
    $region10: #{tpu_custom_call.1} parent=1 // pred_check
      _
    $region11: #{tpu_custom_call.1} parent=1 // pred_check_branch
      %50 = sbr.rel (0) target = $region13
    $region12: #{tpu_custom_call.1} parent=1 // pred_region
      %51 = dma.done [#allocation3], 256
    $region13: #{tpu_custom_call.1} parent=1 // pred_fallthru
      _
    // Predicated region
    $region14: #{tpu_custom_call.1} parent=1 // pred_check
      _
    $region15: #{tpu_custom_call.1} parent=1 // pred_check_branch
      %53 = sbr.rel (0) target = $region17
    $region16: #{tpu_custom_call.1} parent=1 // pred_region
      %54 = dma.done [#allocation6], 256
    $region17: #{tpu_custom_call.1} parent=1 // pred_fallthru
      _
    %s55 = sadd.s32 0, 0
    %p56 = scmp.lt.s32.totalorder %s55, 0
    %s57 = scalar_select %p56, %s55, 0
    %s58 = smul.u32 2, %s57
    %s59 = sadd.s32 0, 0
    %p60 = scmp.lt.s32.totalorder %s59, 0
    %s61 = scalar_select %p60, %s59, 0
    %s62 = smul.u32 2, %s61
    %p63 = scmp.eq.s32.totalorder 0, 0
    // Predicated region
    $region18: #{tpu_custom_call.1} parent=1 // pred_check
      %p64 = pneg %p63
    $region19: #{tpu_custom_call.1} parent=1 // pred_check_branch
      %66 = sbr.rel (%p64) target = $region21
    $region20: #{tpu_custom_call.1} parent=1 // pred_region
      %67 = vst [vmem:[#allocation7] sm:$0xff] 0.0
      %68 = vst [vmem:[#allocation8] sm:$0xff] 0.0
    $region21: #{tpu_custom_call.1} parent=1 // pred_fallthru
      _
    %s69 = sadd.s32 0, 0
    %v70 = vld [vmem:[#allocation2] sm:$0xff]
    %v71 = vld [vmem:[#allocation2 + $0x8] sm:$0xff]
    %v72 = vld [vmem:[#allocation5] sm:$0xff]
    %v73 = vld [vmem:[#allocation5 + $0x8] sm:$0xff]
    %s74 = sadd.s32 %s69, 1
    %s75 = smul.u32 %s74, 16
    %p76 = scmp.le.s32.totalorder %s75, 16
    // Predicated region
    $region22: #{tpu_custom_call.1} parent=1 // pred_check
      %p77 = pneg %p76
    $region23: #{tpu_custom_call.1} parent=1 // pred_check_branch
      %79 = sbr.rel (%p77) target = $region25
    $region24: #{tpu_custom_call.1} parent=1 // pred_region
      %vm80 = vcmp.gt.f32.partialorder %v72, 0.0
      %vm81 = vcmp.gt.f32.partialorder %v73, 0.0
      %v82 = vsub.f32 %v70, %v72
      %v83 = vsub.f32 %v71, %v73
      %v84 = vand.u32 2147483647, %v82
      %v85 = vand.u32 2147483647, %v83
      %v86 = vsel %vm80, %v84, 0.0
      %v87 = vsel %vm81, %v85, 0.0
      %v88 = vsel %vm80, 1.0, 0.0
      %v89 = vsel %vm81, 1.0, 0.0
      %v90 = vld [vmem:[#allocation7] sm:$0xff]
      %v91 = vadd.f32 %v86, %v87
      %v92 = vadd.f32 %v90, %v91
      %93 = vst [vmem:[#allocation7] sm:$0xff] %v92
      %v94 = vld [vmem:[#allocation8] sm:$0xff]
      %v95 = vadd.f32 %v88, %v89
      %v96 = vadd.f32 %v94, %v95
      %97 = vst [vmem:[#allocation8] sm:$0xff] %v96
    $region25: #{tpu_custom_call.1} parent=1 // pred_fallthru
      _
    %p98 = scmp.gt.s32.totalorder %s75, 16
    // Predicated region
    $region26: #{tpu_custom_call.1} parent=1 // pred_check
      %p99 = pneg %p98
    $region27: #{tpu_custom_call.1} parent=1 // pred_check_branch
      %101 = sbr.rel (%p99) target = $region29
    $region28: #{tpu_custom_call.1} parent=1 // pred_region
      %s102 = smul.u32 %s69, 16
      %v103 = vlaneseq
      %v104 = vshrl.u32 %v103, 7
      %v105 = vadd.s32 %v104, 8
      %v106 = vstv %s102
      %v107 = vadd.s32 %v106, %v104
      %v108 = vadd.s32 %v106, %v105
      %vm109 = vcmp.lt.s32.totalorder %v107, 16
      %vm110 = vcmp.lt.s32.totalorder %v108, 16
      %vm111 = vcmp.gt.f32.partialorder %v72, 0.0
      %vm112 = vcmp.gt.f32.partialorder %v73, 0.0
      %vm113 = vmand %vm109, %vm111
      %vm114 = vmand %vm110, %vm112
      %v115 = vsub.f32 %v70, %v72
      %v116 = vsub.f32 %v71, %v73
      %v117 = vand.u32 2147483647, %v115
      %v118 = vand.u32 2147483647, %v116
      %v119 = vsel %vm113, %v117, 0.0
      %v120 = vsel %vm114, %v118, 0.0
      %v121 = vsel %vm113, 1.0, 0.0
      %v122 = vsel %vm114, 1.0, 0.0
      %v123 = vld [vmem:[#allocation7] sm:$0xff]
      %v124 = vadd.f32 %v119, %v120
      %v125 = vadd.f32 %v123, %v124
      %126 = vst [vmem:[#allocation7] sm:$0xff] %v125
      %v127 = vld [vmem:[#allocation8] sm:$0xff]
      %v128 = vadd.f32 %v121, %v122
      %v129 = vadd.f32 %v127, %v128
      %130 = vst [vmem:[#allocation8] sm:$0xff] %v129
    $region29: #{tpu_custom_call.1} parent=1 // pred_fallthru
      _
    // Predicated region
    $region30: #{tpu_custom_call.1} parent=1 // pred_check
      _
    $region31: #{tpu_custom_call.1} parent=1 // pred_check_branch
      %132 = sbr.rel (0) target = $region33
    $region32: #{tpu_custom_call.1} parent=1 // pred_region
      %s134 = ssub.s32 128, 128
      %135 = vsyncadd [#allocation4], %s134
      %s137 = sshll.u32 [#allocation7], 4
      %s138 = int_to_ptr.vmem [resolvable:$true] %s137
      %140 = dma.vmem_to_hbm [thread:$0]  %s138, 128, %s2, [#allocation4]
    $region33: #{tpu_custom_call.1} parent=1 // pred_fallthru
      _
    // Predicated region
    $region34: #{tpu_custom_call.1} parent=1 // pred_check
      _
    $region35: #{tpu_custom_call.1} parent=1 // pred_check_branch
      %142 = sbr.rel (0) target = $region37
    $region36: #{tpu_custom_call.1} parent=1 // pred_region
      %s144 = ssub.s32 128, 128
      %145 = vsyncadd [#allocation9], %s144
      %s147 = sshll.u32 [#allocation8], 4
      %s148 = int_to_ptr.vmem [resolvable:$true] %s147
      %150 = dma.vmem_to_hbm [thread:$0]  %s148, 128, %s3, [#allocation9]
    $region37: #{tpu_custom_call.1} parent=1 // pred_fallthru
      _
    // Predicated region
    $region38: #{tpu_custom_call.1} parent=1 // pred_check
      _
    $region39: #{tpu_custom_call.1} parent=1 // pred_check_branch
      %152 = sbr.rel (0) target = $region41
    $region40: #{tpu_custom_call.1} parent=1 // pred_region
      %153 = dma.done [#allocation4], 128
    $region41: #{tpu_custom_call.1} parent=1 // pred_fallthru
      _
    // Predicated region
    $region42: #{tpu_custom_call.1} parent=1 // pred_check
      _
    $region43: #{tpu_custom_call.1} parent=1 // pred_check_branch
      %155 = sbr.rel (0) target = $region45
    $region44: #{tpu_custom_call.1} parent=1 // pred_region
      %156 = dma.done [#allocation9], 128
    $region45: #{tpu_custom_call.1} parent=1 // pred_fallthru
      _
    %157 = vsyncpa [#allocation3], 1
    %158 = vsyncpa [#allocation6], 1
    %159 = vsyncpa [#allocation4], 1
    %160 = vsyncpa [#allocation9], 1

</llo_original>
